<compile_context>
chip_gen: v6e
topology: v6e:2x2x1
jax: 0.10.0
libtpu: 0.0.40
codegen_flags: <defaults>
</compile_context>

<pallas_src>
import jax
import jax.numpy as jnp
from jax import lax
from jax.experimental import pallas as pl
from jax.experimental.pallas import tpu as pltpu


def _gelu_exact(x):
    # nn.GELU() default (approximate='none'): 0.5*x*(1+erf(x/sqrt(2)))
    return 0.5 * x * (1.0 + lax.erf(x * 0.7071067811865476))


def _make_kernel(num_layers, layer_sizes, num_groups, s_total,
                 eps_gn=1e-5, eps_norm=1e-12):
    """Kernel over grid (batch_tiles, seq_tiles).

    Per step: L2-normalize a (B_tile, S_tile, H) slab of trunk hidden states and
    accumulate the per-row sum into VMEM scratch.  On the last seq step, turn
    the sum into the seq-mean and run the regressor MLP, storing (B_tile, 1).
    """

    def kernel(*refs):
        h_ref = refs[0]
        w_refs = [refs[1 + 2 * l] for l in range(num_layers)]
        g_refs = [refs[2 + 2 * l] for l in range(num_layers)]
        vecs_ref = refs[1 + 2 * num_layers]      # (L, 3, C_max): bias/gamma/beta
        wout_ref = refs[2 + 2 * num_layers]      # (prev, 1)
        bout_ref = refs[3 + 2 * num_layers]      # (1, 1)
        o_ref = refs[4 + 2 * num_layers]         # (B_tile, 1)
        acc_ref = refs[5 + 2 * num_layers]       # (B_tile, H) f32 scratch

        s_idx = pl.program_id(1)
        n_s = pl.num_programs(1)

        # ---- streaming stage: L2-normalize rows + partial seq-sum ----------
        h = h_ref[...].astype(jnp.float32)                      # (Bt, St, H)
        sumsq = jnp.sum(h * h, axis=-1, keepdims=True)          # (Bt, St, 1)
        # torch F.normalize(p=2): v / max(||v||, eps) == v * rsqrt(max(sumsq, eps^2))
        inv = lax.rsqrt(jnp.maximum(sumsq, eps_norm * eps_norm))
        partial = jnp.sum(h * inv, axis=1)                      # (Bt, H)

        @pl.when(s_idx == 0)
        def _init():
            acc_ref[...] = jnp.zeros_like(acc_ref)

        acc_ref[...] = acc_ref[...] + partial

        # ---- finalize: regressor MLP on the seq-mean ------------------------
        @pl.when(s_idx == n_s - 1)
        def _finalize():
            x = acc_ref[...] * (1.0 / float(s_total))           # (Bt, H)
            vecs = vecs_ref[...]                                # (L, 3, C_max)
            bt = x.shape[0]
            for l in range(num_layers):
                c = layer_sizes[l]
                gs = c // num_groups
                w = w_refs[l][...]                              # (prev, C)
                gmat = g_refs[l][...]                           # (C, G) one-hot
                b_l = vecs[l, 0:1, :c]                          # (1, C)
                gamma_l = vecs[l, 1:2, :c]
                beta_l = vecs[l, 2:3, :c]

                # Linear
                x = jnp.dot(x, w, preferred_element_type=jnp.float32) + b_l

                # GroupNorm(num_groups) on (N, C): per-sample per-group mean and
                # biased variance.  Both statistics matmuls fused into one MXU
                # push by stacking [x ; x*x] along the sublane (row) axis.
                stacked = jnp.concatenate([x, x * x], axis=0)               # (2Bt, C)
                stats = jnp.dot(stacked, gmat,
                                preferred_element_type=jnp.float32) / float(gs)
                mean_g = stats[:bt]                                         # (Bt, G)
                meansq_g = stats[bt:]
                # one-pass variance can go slightly negative -> clamp
                var_g = jnp.maximum(meansq_g - mean_g * mean_g, 0.0)
                # broadcast group stats back to channels (contract over G),
                # fused into a single dot_general -- gmatT operand not needed.
                back = lax.dot_general(
                    jnp.concatenate([mean_g, var_g], axis=0), gmat,
                    (((1,), (1,)), ((), ())),
                    preferred_element_type=jnp.float32)                     # (2Bt, C)
                mean = back[:bt]
                var = back[bt:]
                x = (x - mean) * lax.rsqrt(var + eps_gn)
                x = x * gamma_l + beta_l

                # GELU (exact, matches nn.GELU default); Dropout == identity.
                x = _gelu_exact(x)

            wout = wout_ref[...]
            bout = bout_ref[...]
            o_ref[...] = (jnp.dot(x, wout, preferred_element_type=jnp.float32)
                          + bout).astype(o_ref.dtype)

    return kernel


def _full_spec(arr):
    """Whole-array VMEM block pinned across the grid (same block every step)."""
    zeros = (0,) * arr.ndim
    return pl.BlockSpec(arr.shape, lambda b, s, _z=zeros: _z)


def _pick_b_tile(B):
    # Give the grid a batch axis (marked "parallel") so v7x's 2 TensorCores can
    # split the work; harmless (single tile) for small batches.
    if B % 16 == 0:
        return B // 2
    return B


def _pick_s_tile(S, b_tile, H, itemsize, budget_bytes=4 * 1024 * 1024):
    # Largest aligned divisor of S whose (b_tile, s_tile, H) slab stays under
    # ~4 MiB.  Pallas double-buffers it (~8 MiB for h), which fits every
    # generation's scoped VMEM (v5e 16 MiB default, v7x 32 MiB) with headroom,
    # while keeping tiles large enough to amortize the ~0.35us per-step cost.
    if S <= 8:
        return S
    mult = 8 if itemsize >= 4 else (32 // itemsize)   # bf16 -> 16-row alignment
    max_rows = max(mult, budget_bytes // max(1, b_tile * H * itemsize))
    best = None
    for t in range(mult, S + 1, mult):
        if S % t == 0 and t <= max_rows:
            best = t
    return best if best is not None else S


def init_params(key, hidden, layer_sizes, num_groups):
    """Deterministic synthetic parameters matching the PyTorch module shapes."""
    params = {"layers": []}
    prev = hidden
    for size in layer_sizes:
        assert size % num_groups == 0
        key, kw, kb = jax.random.split(key, 3)
        bound = 1.0 / (prev ** 0.5)
        W = jax.random.uniform(kw, (prev, size), jnp.float32, -bound, bound)
        b = jax.random.uniform(kb, (1, size), jnp.float32, -bound, bound)
        gamma = jnp.ones((1, size), jnp.float32)
        beta = jnp.zeros((1, size), jnp.float32)
        gs = size // num_groups
        gidx = jnp.arange(size) // gs
        gmat = (gidx[:, None] == jnp.arange(num_groups)[None, :]).astype(jnp.float32)  # (C, G)
        params["layers"].append(dict(W=W, b=b, gamma=gamma, beta=beta, gmat=gmat))
        prev = size
    key, kw, kb = jax.random.split(key, 3)
    bound = 1.0 / (prev ** 0.5)
    params["Wout"] = jax.random.uniform(kw, (prev, 1), jnp.float32, -bound, bound)
    params["bout"] = jax.random.uniform(kb, (1, 1), jnp.float32, -bound, bound)
    return params


def amplify_regressor_forward(h, params, num_groups, *, b_tile=None, s_tile=None,
                              vmem_limit_bytes=64 * 1024 * 1024):
    B, S, H = h.shape
    layer_sizes = tuple(int(lp["W"].shape[1]) for lp in params["layers"])
    num_layers = len(layer_sizes)
    c_max = max(layer_sizes)
    itemsize = jnp.dtype(h.dtype).itemsize

    if b_tile is None:
        b_tile = _pick_b_tile(B)
    if s_tile is None:
        s_tile = _pick_s_tile(S, b_tile, H, itemsize)
    assert B % b_tile == 0 and S % s_tile == 0

    # Pack the per-layer small vectors (bias, gamma, beta) into one operand
    # instead of three tiny DMA'd tensors per layer.
    vecs = jnp.zeros((num_layers, 3, c_max), jnp.float32)
    for l, lp in enumerate(params["layers"]):
        c = layer_sizes[l]
        vecs = vecs.at[l, 0, :c].set(lp["b"][0])
        vecs = vecs.at[l, 1, :c].set(lp["gamma"][0])
        vecs = vecs.at[l, 2, :c].set(lp["beta"][0])

    flat = [h]
    in_specs = [pl.BlockSpec((b_tile, s_tile, H), lambda b, s: (b, s, 0))]
    for lp in params["layers"]:
        flat += [lp["W"], lp["gmat"]]
        in_specs += [_full_spec(lp["W"]), _full_spec(lp["gmat"])]
    flat += [vecs, params["Wout"], params["bout"]]
    in_specs += [_full_spec(vecs), _full_spec(params["Wout"]), _full_spec(params["bout"])]

    # Advisory cost estimate: dominated by streaming h from HBM.
    param_bytes = sum(int(a.size) * jnp.dtype(a.dtype).itemsize for a in flat[1:])
    bytes_accessed = B * S * H * itemsize + param_bytes + B * 4
    flops = 3 * B * S * H
    prev = H
    for c in layer_sizes:
        flops += 2 * B * prev * c + 8 * B * c * num_groups + 12 * B * c
        prev = c
    flops += 2 * B * prev
    transcendentals = B * S + 2 * B * sum(layer_sizes)
    cost = pl.CostEstimate(flops=int(flops),
                           transcendentals=int(transcendentals),
                           bytes_accessed=int(bytes_accessed))

    kernel = _make_kernel(num_layers, layer_sizes, num_groups, S)
    grid = (B // b_tile, S // s_tile)
    out = pl.pallas_call(
        kernel,
        out_shape=jax.ShapeDtypeStruct((B, 1), jnp.float32),
        grid_spec=pltpu.PrefetchScalarGridSpec(
            num_scalar_prefetch=0,
            grid=grid,
            in_specs=in_specs,
            out_specs=pl.BlockSpec((b_tile, 1), lambda b, s: (b, 0)),
            scratch_shapes=[pltpu.VMEM((b_tile, H), jnp.float32)],
        ),
        compiler_params=pltpu.CompilerParams(
            dimension_semantics=("parallel", "arbitrary"),
            vmem_limit_bytes=vmem_limit_bytes,
        ),
        cost_estimate=cost,
    )(*flat)
    return out


def reference_forward(h, params, num_groups, eps_gn=1e-5):
    """Pure-JAX reference mirroring the PyTorch forward (all math in f32)."""
    hn = h / jnp.maximum(jnp.sqrt(jnp.sum(h * h, axis=-1, keepdims=True)), 1e-12)
    x = hn.mean(axis=1)
    for lp in params["layers"]:
        x = x @ lp["W"] + lp["b"]
        B, C = x.shape
        G = num_groups
        xg = x.reshape(B, G, C // G)
        mu = xg.mean(-1, keepdims=True)
        var = xg.var(-1, keepdims=True)
        xg = (xg - mu) / jnp.sqrt(var + eps_gn)
        x = xg.reshape(B, C) * lp["gamma"] + lp["beta"]
        x = _gelu_exact(x)
    return x @ params["Wout"] + params["bout"]


if __name__ == "__main__":
    B, S, H = 2, 8, 32            # batch, seq, trunk hidden size
    layer_sizes = (32, 16)        # regressor hidden layer sizes
    num_groups = 8

    key = jax.random.PRNGKey(0)
    key, kh = jax.random.split(key)
    h_f32 = jax.random.normal(kh, (B, S, H), jnp.float32)   # synthetic trunk hidden states
    # Feed trunk activations as bf16 (halves the dominant HBM read); the kernel
    # accumulates in f32.
    h = h_f32.astype(jnp.bfloat16)

    params = init_params(key, H, layer_sizes, num_groups)

    out = amplify_regressor_forward(h, params, num_groups)
    out = jax.block_until_ready(out)

    # Reference sees the same bf16-rounded activations; all math in f32.
    ref = reference_forward(h.astype(jnp.float32), params, num_groups)
    assert out.shape == (B, 1)
    assert jnp.allclose(out, ref, atol=1e-4, rtol=1e-4), (out, ref)

    print("KERNEL_OK")
</pallas_src>

<mosaic_0001>
module attributes {stable_mosaic.version = 11 : i64} {
  func.func @kernel(%arg0: i32, %arg1: i32, %arg2: memref<2x8x32xbf16, #tpu.memory_space<vmem>>, %arg3: memref<32x32xf32, #tpu.memory_space<vmem>>, %arg4: memref<32x8xf32, #tpu.memory_space<vmem>>, %arg5: memref<32x16xf32, #tpu.memory_space<vmem>>, %arg6: memref<16x8xf32, #tpu.memory_space<vmem>>, %arg7: memref<2x3x32xf32, #tpu.memory_space<vmem>>, %arg8: memref<16x1xf32, #tpu.memory_space<vmem>>, %arg9: memref<1x1xf32, #tpu.memory_space<vmem>>, %arg10: memref<2x1xf32, #tpu.memory_space<vmem>>, %arg11: memref<2x32xf32, #tpu.memory_space<vmem>>) attributes {dimension_semantics = [#tpu.dimension_semantics<parallel>, #tpu.dimension_semantics<arbitrary>], iteration_bounds = array<i64: 1, 1>, scalar_prefetch = 0 : i64, scratch_operands = 1 : i64, tpu.core_type = #tpu.core_type<tc>, window_params = [{transform_indices = @transform_0, window_bounds = array<i64: 2, 8, 32>}, {pipeline_mode = #tpu.pipeline_mode<synchronous>, transform_indices = @transform_1, window_bounds = array<i64: 32, 32>}, {pipeline_mode = #tpu.pipeline_mode<synchronous>, transform_indices = @transform_2, window_bounds = array<i64: 32, 8>}, {pipeline_mode = #tpu.pipeline_mode<synchronous>, transform_indices = @transform_3, window_bounds = array<i64: 32, 16>}, {pipeline_mode = #tpu.pipeline_mode<synchronous>, transform_indices = @transform_4, window_bounds = array<i64: 16, 8>}, {pipeline_mode = #tpu.pipeline_mode<synchronous>, transform_indices = @transform_5, window_bounds = array<i64: 2, 3, 32>}, {pipeline_mode = #tpu.pipeline_mode<synchronous>, transform_indices = @transform_6, window_bounds = array<i64: 16, 1>}, {pipeline_mode = #tpu.pipeline_mode<synchronous>, transform_indices = @transform_7, window_bounds = array<i64: 1, 1>}, {transform_indices = @transform_8, window_bounds = array<i64: 2, 1>}]} {
    %c0 = arith.constant 0 : index
    %c0_0 = arith.constant 0 : index
    %c0_1 = arith.constant 0 : index
    %0 = vector.load %arg2[%c0, %c0_0, %c0_1] : memref<2x8x32xbf16, #tpu.memory_space<vmem>>, vector<2x8x32xbf16>
    %1 = arith.extf %0 : vector<2x8x32xbf16> to vector<2x8x32xf32>
    %2 = arith.mulf %1, %1 : vector<2x8x32xf32>
    %cst = arith.constant dense<0.000000e+00> : vector<2x8xf32>
    %3 = vector.multi_reduction <add>, %2, %cst [2] : vector<2x8x32xf32> to vector<2x8xf32>
    %4 = vector.shape_cast %3 : vector<2x8xf32> to vector<2x8x1xf32>
    %cst_2 = arith.constant 1.000000e-24 : f32
    %5 = vector.broadcast %cst_2 : f32 to vector<2x8x1xf32>
    %6 = arith.maximumf %4, %5 : vector<2x8x1xf32>
    %7 = math.rsqrt %6 : vector<2x8x1xf32>
    %8 = vector.broadcast %7 : vector<2x8x1xf32> to vector<2x8x32xf32>
    %9 = arith.mulf %1, %8 : vector<2x8x32xf32>
    %cst_3 = arith.constant dense<0.000000e+00> : vector<2x32xf32>
    %10 = vector.multi_reduction <add>, %9, %cst_3 [1] : vector<2x8x32xf32> to vector<2x32xf32>
    %c0_i32 = arith.constant 0 : i32
    %11 = arith.cmpi eq, %arg1, %c0_i32 : i32
    %12 = arith.extui %11 : i1 to i32
    %c0_i32_4 = arith.constant 0 : i32
    %13 = arith.cmpi ne, %12, %c0_i32_4 : i32
    scf.if %13 {
      %cst_11 = arith.constant 0.000000e+00 : f32
      %20 = vector.broadcast %cst_11 : f32 to vector<2x32xf32>
      %c0_12 = arith.constant 0 : index
      %c0_13 = arith.constant 0 : index
      %21 = vector.load %arg11[%c0_12, %c0_13] : memref<2x32xf32, #tpu.memory_space<vmem>>, vector<2x32xf32>
      tpu.vector_store %arg11[%c0_12, %c0_13], %20 {strides = array<i32>} : memref<2x32xf32, #tpu.memory_space<vmem>>, vector<2x32xf32>,
    } else {
    }
    %c0_5 = arith.constant 0 : index
    %c0_6 = arith.constant 0 : index
    %14 = vector.load %arg11[%c0_5, %c0_6] : memref<2x32xf32, #tpu.memory_space<vmem>>, vector<2x32xf32>
    %15 = arith.addf %14, %10 : vector<2x32xf32>
    %c0_7 = arith.constant 0 : index
    %c0_8 = arith.constant 0 : index
    %16 = vector.load %arg11[%c0_7, %c0_8] : memref<2x32xf32, #tpu.memory_space<vmem>>, vector<2x32xf32>
    tpu.vector_store %arg11[%c0_7, %c0_8], %15 {strides = array<i32>} : memref<2x32xf32, #tpu.memory_space<vmem>>, vector<2x32xf32>,
    %c0_i32_9 = arith.constant 0 : i32
    %17 = arith.cmpi eq, %arg1, %c0_i32_9 : i32
    %18 = arith.extui %17 : i1 to i32
    %c0_i32_10 = arith.constant 0 : i32
    %19 = arith.cmpi ne, %18, %c0_i32_10 : i32
    scf.if %19 {
      %c0_11 = arith.constant 0 : index
      %c0_12 = arith.constant 0 : index
      %20 = vector.load %arg11[%c0_11, %c0_12] : memref<2x32xf32, #tpu.memory_space<vmem>>, vector<2x32xf32>
      %cst_13 = arith.constant 1.250000e-01 : f32
      %21 = vector.broadcast %cst_13 : f32 to vector<2x32xf32>
      %22 = arith.mulf %20, %21 : vector<2x32xf32>
      %c0_14 = arith.constant 0 : index
      %c0_15 = arith.constant 0 : index
      %c0_16 = arith.constant 0 : index
      %23 = vector.load %arg7[%c0_14, %c0_15, %c0_16] : memref<2x3x32xf32, #tpu.memory_space<vmem>>, vector<2x3x32xf32>
      %c0_17 = arith.constant 0 : index
      %c0_18 = arith.constant 0 : index
      %24 = vector.load %arg3[%c0_17, %c0_18] : memref<32x32xf32, #tpu.memory_space<vmem>>, vector<32x32xf32>
      %c0_19 = arith.constant 0 : index
      %c0_20 = arith.constant 0 : index
      %25 = vector.load %arg4[%c0_19, %c0_20] : memref<32x8xf32, #tpu.memory_space<vmem>>, vector<32x8xf32>
      %26 = vector.extract_strided_slice %23 {offsets = [0, 0, 0], sizes = [1, 1, 32], strides = [1, 1, 1]} : vector<2x3x32xf32> to vector<1x1x32xf32>
      %27 = vector.shape_cast %26 : vector<1x1x32xf32> to vector<1x32xf32>
      %28 = vector.extract_strided_slice %23 {offsets = [0, 1, 0], sizes = [1, 1, 32], strides = [1, 1, 1]} : vector<2x3x32xf32> to vector<1x1x32xf32>
      %29 = vector.shape_cast %28 : vector<1x1x32xf32> to vector<1x32xf32>
      %30 = vector.extract_strided_slice %23 {offsets = [0, 2, 0], sizes = [1, 1, 32], strides = [1, 1, 1]} : vector<2x3x32xf32> to vector<1x1x32xf32>
      %31 = vector.shape_cast %30 : vector<1x1x32xf32> to vector<1x32xf32>
      %cst_21 = arith.constant dense<0.000000e+00> : vector<2x32xf32>
      %32 = tpu.matmul %22, %24, %cst_21 {dimension_numbers = #tpu.dot_dimension_numbers<[1], [0], [0], [1], [0, 0, 1, 1], [], []>} : vector<2x32xf32>, vector<32x32xf32>, vector<2x32xf32> -> vector<2x32xf32>
      %33 = vector.broadcast %27 : vector<1x32xf32> to vector<2x32xf32>
      %34 = arith.addf %32, %33 : vector<2x32xf32>
      %35 = arith.mulf %34, %34 : vector<2x32xf32>
      %36 = tpu.concatenate %34, %35 in 0 : vector<2x32xf32>, vector<2x32xf32> -> vector<4x32xf32>
      %cst_22 = arith.constant dense<0.000000e+00> : vector<4x8xf32>
      %37 = tpu.matmul %36, %25, %cst_22 {dimension_numbers = #tpu.dot_dimension_numbers<[1], [0], [0], [1], [0, 0, 1, 1], [], []>} : vector<4x32xf32>, vector<32x8xf32>, vector<4x8xf32> -> vector<4x8xf32>
      %cst_23 = arith.constant 4.000000e+00 : f32
      %38 = vector.broadcast %cst_23 : f32 to vector<4x8xf32>
      %39 = arith.divf %37, %38 : vector<4x8xf32>
      %40 = vector.extract_strided_slice %39 {offsets = [0, 0], sizes = [2, 8], strides = [1, 1]} : vector<4x8xf32> to vector<2x8xf32>
      %41 = vector.extract_strided_slice %39 {offsets = [2, 0], sizes = [2, 8], strides = [1, 1]} : vector<4x8xf32> to vector<2x8xf32>
      %42 = arith.mulf %40, %40 : vector<2x8xf32>
      %43 = arith.subf %41, %42 : vector<2x8xf32>
      %cst_24 = arith.constant 0.000000e+00 : f32
      %44 = vector.broadcast %cst_24 : f32 to vector<2x8xf32>
      %45 = arith.maximumf %43, %44 : vector<2x8xf32>
      %46 = tpu.concatenate %40, %45 in 0 : vector<2x8xf32>, vector<2x8xf32> -> vector<4x8xf32>
      %cst_25 = arith.constant dense<0.000000e+00> : vector<4x32xf32>
      %47 = tpu.matmul %46, %25, %cst_25 {dimension_numbers = #tpu.dot_dimension_numbers<[1], [1], [0], [0], [0, 0, 1, 0], [], []>} : vector<4x8xf32>, vector<32x8xf32>, vector<4x32xf32> -> vector<4x32xf32>
      %48 = vector.extract_strided_slice %47 {offsets = [0, 0], sizes = [2, 32], strides = [1, 1]} : vector<4x32xf32> to vector<2x32xf32>
      %49 = vector.extract_strided_slice %47 {offsets = [2, 0], sizes = [2, 32], strides = [1, 1]} : vector<4x32xf32> to vector<2x32xf32>
      %50 = arith.subf %34, %48 : vector<2x32xf32>
      %cst_26 = arith.constant 9.99999974E-6 : f32
      %51 = vector.broadcast %cst_26 : f32 to vector<2x32xf32>
      %52 = arith.addf %49, %51 : vector<2x32xf32>
      %53 = math.rsqrt %52 : vector<2x32xf32>
      %54 = arith.mulf %50, %53 : vector<2x32xf32>
      %55 = vector.broadcast %29 : vector<1x32xf32> to vector<2x32xf32>
      %56 = arith.mulf %54, %55 : vector<2x32xf32>
      %57 = vector.broadcast %31 : vector<1x32xf32> to vector<2x32xf32>
      %58 = arith.addf %56, %57 : vector<2x32xf32>
      %cst_27 = arith.constant 5.000000e-01 : f32
      %59 = vector.broadcast %cst_27 : f32 to vector<2x32xf32>
      %60 = arith.mulf %59, %58 : vector<2x32xf32>
      %cst_28 = arith.constant 0.707106769 : f32
      %61 = vector.broadcast %cst_28 : f32 to vector<2x32xf32>
      %62 = arith.mulf %58, %61 : vector<2x32xf32>
      %63 = math.erf %62 : vector<2x32xf32>
      %cst_29 = arith.constant 1.000000e+00 : f32
      %64 = vector.broadcast %cst_29 : f32 to vector<2x32xf32>
      %65 = arith.addf %64, %63 : vector<2x32xf32>
      %66 = arith.mulf %60, %65 : vector<2x32xf32>
      %c0_30 = arith.constant 0 : index
      %c0_31 = arith.constant 0 : index
      %67 = vector.load %arg5[%c0_30, %c0_31] : memref<32x16xf32, #tpu.memory_space<vmem>>, vector<32x16xf32>
      %c0_32 = arith.constant 0 : index
      %c0_33 = arith.constant 0 : index
      %68 = vector.load %arg6[%c0_32, %c0_33] : memref<16x8xf32, #tpu.memory_space<vmem>>, vector<16x8xf32>
      %69 = vector.extract_strided_slice %23 {offsets = [1, 0, 0], sizes = [1, 1, 16], strides = [1, 1, 1]} : vector<2x3x32xf32> to vector<1x1x16xf32>
      %70 = vector.shape_cast %69 : vector<1x1x16xf32> to vector<1x16xf32>
      %71 = vector.extract_strided_slice %23 {offsets = [1, 1, 0], sizes = [1, 1, 16], strides = [1, 1, 1]} : vector<2x3x32xf32> to vector<1x1x16xf32>
      %72 = vector.shape_cast %71 : vector<1x1x16xf32> to vector<1x16xf32>
      %73 = vector.extract_strided_slice %23 {offsets = [1, 2, 0], sizes = [1, 1, 16], strides = [1, 1, 1]} : vector<2x3x32xf32> to vector<1x1x16xf32>
      %74 = vector.shape_cast %73 : vector<1x1x16xf32> to vector<1x16xf32>
      %cst_34 = arith.constant dense<0.000000e+00> : vector<2x16xf32>
      %75 = tpu.matmul %66, %67, %cst_34 {dimension_numbers = #tpu.dot_dimension_numbers<[1], [0], [0], [1], [0, 0, 1, 1], [], []>} : vector<2x32xf32>, vector<32x16xf32>, vector<2x16xf32> -> vector<2x16xf32>
      %76 = vector.broadcast %70 : vector<1x16xf32> to vector<2x16xf32>
      %77 = arith.addf %75, %76 : vector<2x16xf32>
      %78 = arith.mulf %77, %77 : vector<2x16xf32>
      %79 = tpu.concatenate %77, %78 in 0 : vector<2x16xf32>, vector<2x16xf32> -> vector<4x16xf32>
      %cst_35 = arith.constant dense<0.000000e+00> : vector<4x8xf32>
      %80 = tpu.matmul %79, %68, %cst_35 {dimension_numbers = #tpu.dot_dimension_numbers<[1], [0], [0], [1], [0, 0, 1, 1], [], []>} : vector<4x16xf32>, vector<16x8xf32>, vector<4x8xf32> -> vector<4x8xf32>
      %cst_36 = arith.constant 2.000000e+00 : f32
      %81 = vector.broadcast %cst_36 : f32 to vector<4x8xf32>
      %82 = arith.divf %80, %81 : vector<4x8xf32>
      %83 = vector.extract_strided_slice %82 {offsets = [0, 0], sizes = [2, 8], strides = [1, 1]} : vector<4x8xf32> to vector<2x8xf32>
      %84 = vector.extract_strided_slice %82 {offsets = [2, 0], sizes = [2, 8], strides = [1, 1]} : vector<4x8xf32> to vector<2x8xf32>
      %85 = arith.mulf %83, %83 : vector<2x8xf32>
      %86 = arith.subf %84, %85 : vector<2x8xf32>
      %cst_37 = arith.constant 0.000000e+00 : f32
      %87 = vector.broadcast %cst_37 : f32 to vector<2x8xf32>
      %88 = arith.maximumf %86, %87 : vector<2x8xf32>
      %89 = tpu.concatenate %83, %88 in 0 : vector<2x8xf32>, vector<2x8xf32> -> vector<4x8xf32>
      %cst_38 = arith.constant dense<0.000000e+00> : vector<4x16xf32>
      %90 = tpu.matmul %89, %68, %cst_38 {dimension_numbers = #tpu.dot_dimension_numbers<[1], [1], [0], [0], [0, 0, 1, 0], [], []>} : vector<4x8xf32>, vector<16x8xf32>, vector<4x16xf32> -> vector<4x16xf32>
      %91 = vector.extract_strided_slice %90 {offsets = [0, 0], sizes = [2, 16], strides = [1, 1]} : vector<4x16xf32> to vector<2x16xf32>
      %92 = vector.extract_strided_slice %90 {offsets = [2, 0], sizes = [2, 16], strides = [1, 1]} : vector<4x16xf32> to vector<2x16xf32>
      %93 = arith.subf %77, %91 : vector<2x16xf32>
      %cst_39 = arith.constant 9.99999974E-6 : f32
      %94 = vector.broadcast %cst_39 : f32 to vector<2x16xf32>
      %95 = arith.addf %92, %94 : vector<2x16xf32>
      %96 = math.rsqrt %95 : vector<2x16xf32>
      %97 = arith.mulf %93, %96 : vector<2x16xf32>
      %98 = vector.broadcast %72 : vector<1x16xf32> to vector<2x16xf32>
      %99 = arith.mulf %97, %98 : vector<2x16xf32>
      %100 = vector.broadcast %74 : vector<1x16xf32> to vector<2x16xf32>
      %101 = arith.addf %99, %100 : vector<2x16xf32>
      %cst_40 = arith.constant 5.000000e-01 : f32
      %102 = vector.broadcast %cst_40 : f32 to vector<2x16xf32>
      %103 = arith.mulf %102, %101 : vector<2x16xf32>
      %cst_41 = arith.constant 0.707106769 : f32
      %104 = vector.broadcast %cst_41 : f32 to vector<2x16xf32>
      %105 = arith.mulf %101, %104 : vector<2x16xf32>
      %106 = math.erf %105 : vector<2x16xf32>
      %cst_42 = arith.constant 1.000000e+00 : f32
      %107 = vector.broadcast %cst_42 : f32 to vector<2x16xf32>
      %108 = arith.addf %107, %106 : vector<2x16xf32>
      %109 = arith.mulf %103, %108 : vector<2x16xf32>
      %c0_43 = arith.constant 0 : index
      %c0_44 = arith.constant 0 : index
      %110 = vector.load %arg8[%c0_43, %c0_44] : memref<16x1xf32, #tpu.memory_space<vmem>>, vector<16x1xf32>
      %c0_45 = arith.constant 0 : index
      %c0_46 = arith.constant 0 : index
      %111 = vector.load %arg9[%c0_45, %c0_46] : memref<1x1xf32, #tpu.memory_space<vmem>>, vector<1x1xf32>
      %cst_47 = arith.constant dense<0.000000e+00> : vector<2x1xf32>
      %112 = tpu.matmul %109, %110, %cst_47 {dimension_numbers = #tpu.dot_dimension_numbers<[1], [0], [0], [1], [0, 0, 1, 1], [], []>} : vector<2x16xf32>, vector<16x1xf32>, vector<2x1xf32> -> vector<2x1xf32>
      %113 = vector.broadcast %111 : vector<1x1xf32> to vector<2x1xf32>
      %114 = arith.addf %112, %113 : vector<2x1xf32>
      %c0_48 = arith.constant 0 : index
      %c0_49 = arith.constant 0 : index
      %115 = vector.load %arg10[%c0_48, %c0_49] : memref<2x1xf32, #tpu.memory_space<vmem>>, vector<2x1xf32>
      tpu.vector_store %arg10[%c0_48, %c0_49], %114 {strides = array<i32>} : memref<2x1xf32, #tpu.memory_space<vmem>>, vector<2x1xf32>,
    } else {
    }
    return
  }
  func.func @transform_0(%arg0: i32, %arg1: i32) -> (i32, i32, i32) {
    %c0_i32 = arith.constant 0 : i32
    %c0_i32_0 = arith.constant 0 : i32
    return %arg0, %arg1, %c0_i32 : i32, i32, i32
  }
  func.func @transform_1(%arg0: i32, %arg1: i32) -> (i32, i32) {
    %c0_i32 = arith.constant 0 : i32
    %c0_i32_0 = arith.constant 0 : i32
    %c0_i32_1 = arith.constant 0 : i32
    return %c0_i32, %c0_i32_0 : i32, i32
  }
  func.func @transform_2(%arg0: i32, %arg1: i32) -> (i32, i32) {
    %c0_i32 = arith.constant 0 : i32
    %c0_i32_0 = arith.constant 0 : i32
    %c0_i32_1 = arith.constant 0 : i32
    return %c0_i32, %c0_i32_0 : i32, i32
  }
  func.func @transform_3(%arg0: i32, %arg1: i32) -> (i32, i32) {
    %c0_i32 = arith.constant 0 : i32
    %c0_i32_0 = arith.constant 0 : i32
    %c0_i32_1 = arith.constant 0 : i32
    return %c0_i32, %c0_i32_0 : i32, i32
  }
  func.func @transform_4(%arg0: i32, %arg1: i32) -> (i32, i32) {
    %c0_i32 = arith.constant 0 : i32
    %c0_i32_0 = arith.constant 0 : i32
    %c0_i32_1 = arith.constant 0 : i32
    return %c0_i32, %c0_i32_0 : i32, i32
  }
  func.func @transform_5(%arg0: i32, %arg1: i32) -> (i32, i32, i32) {
    %c0_i32 = arith.constant 0 : i32
    %c0_i32_0 = arith.constant 0 : i32
    %c0_i32_1 = arith.constant 0 : i32
    %c0_i32_2 = arith.constant 0 : i32
    return %c0_i32, %c0_i32_0, %c0_i32_1 : i32, i32, i32
  }
  func.func @transform_6(%arg0: i32, %arg1: i32) -> (i32, i32) {
    %c0_i32 = arith.constant 0 : i32
    %c0_i32_0 = arith.constant 0 : i32
    %c0_i32_1 = arith.constant 0 : i32
    return %c0_i32, %c0_i32_0 : i32, i32
  }
  func.func @transform_7(%arg0: i32, %arg1: i32) -> (i32, i32) {
    %c0_i32 = arith.constant 0 : i32
    %c0_i32_0 = arith.constant 0 : i32
    %c0_i32_1 = arith.constant 0 : i32
    return %c0_i32, %c0_i32_0 : i32, i32
  }
  func.func @transform_8(%arg0: i32, %arg1: i32) -> (i32, i32) {
    %c0_i32 = arith.constant 0 : i32
    %c0_i32_0 = arith.constant 0 : i32
    return %arg0, %c0_i32 : i32, i32
  }
}

</mosaic_0001>

<llo_original>
// kernel: tpu_custom_call.1
$region0: #{tpu_custom_call.1}
  #allocation0 [shape = 'u32[]', space=smem, size = 0x4, offset = 0x4, fixed_abs, tag = 'smem constant byte address 0x4 - core index']
  #allocation1 [shape = 'u32[144,128]{1,0:T(1,128)}', space=vmem, size = 0x12000, scoped, tag = 'internal scratch']
  #allocation2 [shape = 'f32[2,32]{1,0:T(2,128)}', space=vmem, size = 0x400, scoped, tag = 'scratch operand']
  #allocation3 [shape = 'f32[1,1]{1,0:T(1,128)S(1)}', space=vmem, size = 0x200, scoped, tag = 'scoped memory for tpu_custom_call.1']
  %s0 = inlined_call_operand.vmem [shape: bf16[2,8,32], index: 0, kind: input, shape index: {}]
  %s1 = inlined_call_operand.vmem [shape: f32[32,32], index: 1, kind: input, shape index: {}]
  %s2 = inlined_call_operand.vmem [shape: f32[32,8], index: 2, kind: input, shape index: {}]
  %s3 = inlined_call_operand.vmem [shape: f32[32,16], index: 3, kind: input, shape index: {}]
  %s4 = inlined_call_operand.vmem [shape: f32[16,8], index: 4, kind: input, shape index: {}]
  %s5 = inlined_call_operand.vmem [shape: f32[2,3,32], index: 5, kind: input, shape index: {}]
  %s6 = inlined_call_operand.vmem [shape: f32[16,1], index: 6, kind: input, shape index: {}]
  %s7 = inlined_call_operand.<no memory space> [shape: f32[1,1], index: 7, kind: input, shape index: {}]
  %s8 = inlined_call_operand.vmem [shape: f32[2,1], index: 8, kind: output, shape index: {}]
  %s9 = sld [smem:[#allocation0]]
  $region50: #{tpu_custom_call.1} parent=0
    _
  %s11 = ssub.s32 1, %s9
  %s12 = scalar_select 0, %s11, %s9
  %v13 = vstv %s7
  %14 = vst [vmem:[#allocation3] sm:$0x1] %v13
  // Predicated region
  $region2: #{tpu_custom_call.1} parent=0 // pred_check
    _
  $region3: #{tpu_custom_call.1} parent=0 // pred_check_branch
    %16 = sbr.rel (0) target = $region5
  $region4: #{tpu_custom_call.1} parent=0 // pred_region
    _
  $region5: #{tpu_custom_call.1} parent=0 // pred_fallthru
    _
  // Predicated region
  $region6: #{tpu_custom_call.1} parent=0 // pred_check
    _
  $region7: #{tpu_custom_call.1} parent=0 // pred_check_branch
    %18 = sbr.rel (0) target = $region9
  $region8: #{tpu_custom_call.1} parent=0 // pred_region
    _
  $region9: #{tpu_custom_call.1} parent=0 // pred_fallthru
    _
  // Predicated region
  $region10: #{tpu_custom_call.1} parent=0 // pred_check
    _
  $region11: #{tpu_custom_call.1} parent=0 // pred_check_branch
    %20 = sbr.rel (0) target = $region13
  $region12: #{tpu_custom_call.1} parent=0 // pred_region
    _
  $region13: #{tpu_custom_call.1} parent=0 // pred_fallthru
    _
  // Predicated region
  $region14: #{tpu_custom_call.1} parent=0 // pred_check
    _
  $region15: #{tpu_custom_call.1} parent=0 // pred_check_branch
    %22 = sbr.rel (0) target = $region17
  $region16: #{tpu_custom_call.1} parent=0 // pred_region
    _
  $region17: #{tpu_custom_call.1} parent=0 // pred_fallthru
    _
  // Predicated region
  $region18: #{tpu_custom_call.1} parent=0 // pred_check
    _
  $region19: #{tpu_custom_call.1} parent=0 // pred_check_branch
    %24 = sbr.rel (0) target = $region21
  $region20: #{tpu_custom_call.1} parent=0 // pred_region
    _
  $region21: #{tpu_custom_call.1} parent=0 // pred_fallthru
    _
  // Predicated region
  $region22: #{tpu_custom_call.1} parent=0 // pred_check
    _
  $region23: #{tpu_custom_call.1} parent=0 // pred_check_branch
    %26 = sbr.rel (0) target = $region25
  $region24: #{tpu_custom_call.1} parent=0 // pred_region
    _
  $region25: #{tpu_custom_call.1} parent=0 // pred_fallthru
    _
  // Predicated region
  $region26: #{tpu_custom_call.1} parent=0 // pred_check
    _
  $region27: #{tpu_custom_call.1} parent=0 // pred_check_branch
    %28 = sbr.rel (0) target = $region29
  $region28: #{tpu_custom_call.1} parent=0 // pred_region
    _
  $region29: #{tpu_custom_call.1} parent=0 // pred_fallthru
    _
  // Predicated region
  $region30: #{tpu_custom_call.1} parent=0 // pred_check
    _
  $region31: #{tpu_custom_call.1} parent=0 // pred_check_branch
    %30 = sbr.rel (0) target = $region33
  $region32: #{tpu_custom_call.1} parent=0 // pred_region
    _
  $region33: #{tpu_custom_call.1} parent=0 // pred_fallthru
    _
  %v31 = vld [vmem:[%s0] sm:$0xf]
  %v32 = vld [vmem:[%s0 + $0x4] sm:$0xf]
  %v33 = vunpack.c.l.bf16 %v31
  %v34 = vunpack.c.l.bf16 %v32
  %v35 = vmul.f32 %v33, %v33
  %v36 = vmul.f32 %v34, %v34
  %vm37 = vcmask 261120
  %v38 = vsel %vm37, %v35, 0.0
  %39 = vadd.xlane.f32.xlu0 %v38
  %v40 = vpop.xlane.xlu0 %39
  %v41 = vsel %vm37, %v36, 0.0
  %42 = vadd.xlane.f32.xlu0 %v41
  %v43 = vpop.xlane.xlu0 %42
  %v44 = vmax.f32 %v40, 1e-24
  %v45 = vmax.f32 %v43, 1e-24
  %v46 = vrsqrt.pop %v44
  %v47 = vrsqrt.pop %v45
  %v48 = vmul.f32 %v33, %v46
  %v49 = vmul.f32 %v34, %v47
  %v50 = vsel %vm37, %v48, 0.0
  %v51 = vrot.slane %v50, 4
  %v52 = vadd.f32 %v50, %v51
  %v53 = vrot.slane %v52, 2
  %v54 = vadd.f32 %v52, %v53
  %v55 = vrot.slane %v54, 1
  %v56 = vadd.f32 %v54, %v55
  %v57 = vsel %vm37, %v49, 0.0
  %v58 = vrot.slane %v57, 4
  %v59 = vadd.f32 %v57, %v58
  %v60 = vrot.slane %v59, 2
  %v61 = vadd.f32 %v59, %v60
  %v62 = vrot.slane %v61, 1
  %v63 = vadd.f32 %v61, %v62
  %p64 = scmp.eq.s32.totalorder 0, 0
  // Predicated region
  $region34: #{tpu_custom_call.1} parent=0 // pred_check
    %p65 = pneg %p64
  $region35: #{tpu_custom_call.1} parent=0 // pred_check_branch
    %67 = sbr.rel (%p65) target = $region37
  $region36: #{tpu_custom_call.1} parent=0 // pred_region
    %vm68 = vcmask 254976
    %69 = vst.msk [vmem:[#allocation2] sm:$0x3] %vm68, 0.0
  $region37: #{tpu_custom_call.1} parent=0 // pred_fallthru
    _
  %v70 = vld [vmem:[#allocation2] sm:$0x3]
  %vm73 = vcmask 1041409
  %v74 = vsel %vm73, %v63, %v56
  %v76 = vadd.f32 %v70, %v74
  %vm77 = vcmask 254976
  %78 = vst.msk [vmem:[#allocation2] sm:$0x3] %vm77, %v76
  // Predicated region
  $region38: #{tpu_custom_call.1} parent=0 // pred_check
    %p79 = pneg %p64
  $region39: #{tpu_custom_call.1} parent=0 // pred_check_branch
    %81 = sbr.rel (%p79) target = $region41
  $region40: #{tpu_custom_call.1} parent=0 // pred_region
    %v82 = vld [vmem:[#allocation2] sm:$0x3]
    %v83 = vmul.f32 %v82, 0.125
    %v84 = vld [vmem:[%s5] sm:$0x7]
    %v85 = vld [vmem:[%s5 + $0x4] sm:$0x7]
    %v86 = vld [vmem:[%s1] sm:$0xff]
    %v87 = vld [vmem:[%s1 + $0x8] sm:$0xff]
    %v88 = vld [vmem:[%s1 + $0x10] sm:$0xff]
    %v89 = vld [vmem:[%s1 + $0x18] sm:$0xff]
    %v90 = vld [vmem:[%s2] sm:$0xff]
    %v91 = vld [vmem:[%s2 + $0x8] sm:$0xff]
    %v92 = vld [vmem:[%s2 + $0x10] sm:$0xff]
    %v93 = vld [vmem:[%s2 + $0x18] sm:$0xff]
    %v94 = vlaneseq
    %v95 = vshrl.u32 %v94, 7
    %v96 = vsub.s32 0, %v95
    %v97 = vrot.slane %v84, %v96
    %v99 = vsel %vm37, %v83, 0
    %101 = vmatprep.subr.mxu0 0.0
    %102 = vmatpush1.msra.mxu0 0.0
    %103 = vmatprep.subr.mxu0 0.0
    %104 = vmatpush1.msra.mxu0 0.0
    %105 = vmatprep.subr.mxu0 0.0
    %106 = vmatpush1.msra.mxu0 0.0
    %107 = vmatprep.subr.mxu0 0.0
    %108 = vmatpush1.msra.mxu0 0.0
    %109 = vmatprep.subr.mxu0 0.0
    %110 = vmatpush1.msra.mxu0 0.0
    %111 = vmatprep.subr.mxu0 0.0
    %112 = vmatpush1.msra.mxu0 0.0
    %113 = vmatprep.subr.mxu0 0.0
    %114 = vmatpush1.msra.mxu0 0.0
    %115 = vmatprep.subr.mxu0 0.0
    %116 = vmatpush1.msra.mxu0 0.0
    %117 = vmatprep.subr.mxu0 0.0
    %118 = vmatpush1.msra.mxu0 0.0
    %119 = vmatprep.subr.mxu0 0.0
    %120 = vmatpush1.msra.mxu0 0.0
    %121 = vmatprep.subr.mxu0 0.0
    %122 = vmatpush1.msra.mxu0 0.0
    %123 = vmatprep.subr.mxu0 0.0
    %124 = vmatpush1.msra.mxu0 0.0
    %125 = vmatprep.subr.mxu0 0.0
    %126 = vmatpush1.msra.mxu0 %v89
    %127 = vmatprep.subr.mxu0 0.0
    %128 = vmatpush1.msra.mxu0 %v88
    %129 = vmatprep.subr.mxu0 0.0
    %130 = vmatpush1.msra.mxu0 %v87
    %131 = vmatprep.subr.mxu0 0.0
    %132 = vmatpush1.msra.mxu0 %v86
    %133 = vmatprep.subr.mxu0 0.0
    %134 = vmatpush2.msra.mxu0 0.0
    %135 = vmatprep.subr.mxu0 0.0
    %136 = vmatpush2.msra.mxu0 0.0
    %137 = vmatprep.subr.mxu0 0.0
    %138 = vmatpush2.msra.mxu0 0.0
    %139 = vmatprep.subr.mxu0 0.0
    %140 = vmatpush2.msra.mxu0 0.0
    %141 = vmatprep.subr.mxu0 0.0
    %142 = vmatpush2.msra.mxu0 0.0
    %143 = vmatprep.subr.mxu0 0.0
    %144 = vmatpush2.msra.mxu0 0.0
    %145 = vmatprep.subr.mxu0 0.0
    %146 = vmatpush2.msra.mxu0 0.0
    %147 = vmatprep.subr.mxu0 0.0
    %148 = vmatpush2.msra.mxu0 0.0
    %149 = vmatprep.subr.mxu0 0.0
    %150 = vmatpush2.msra.mxu0 0.0
    %151 = vmatprep.subr.mxu0 0.0
    %152 = vmatpush2.msra.mxu0 0.0
    %153 = vmatprep.subr.mxu0 0.0
    %154 = vmatpush2.msra.mxu0 0.0
    %155 = vmatprep.subr.mxu0 0.0
    %156 = vmatpush2.msra.mxu0 0.0
    %157 = vmatprep.subr.mxu0 0.0
    %158 = vmatpush2.msra.mxu0 0.0
    %159 = vmatprep.subr.mxu0 0.0
    %160 = vmatpush2.msra.mxu0 0.0
    %161 = vmatprep.subr.mxu0 0.0
    %162 = vmatpush2.msra.mxu0 0.0
    %163 = vmatprep.subr.mxu0 0.0
    %164 = vmatpush2.msra.mxu0 0.0
    %165 = vmatprep.mubr.f32.mxu0 0.0
    %166 = vmatmul.mubr.f32.gmra.mxu0 %v99
    %v167 = vpop.f32.mrf.mxu0
    %v168 = vadd.f32 %v97, %v167
    %v169 = vpop.f32.mrf.mxu0
    %170 = vdwg.mxu0
    %v171 = vmul.f32 %v168, %v168
    %v173 = vrot.slane %v171, 6
    %vm175 = vcmask 1041408
    %v176 = vsel %vm175, %v168, %v173
    %v178 = vsel %vm37, %v176, 0
    %180 = vmatprep.subr.mxu0 0.0
    %181 = vmatpush1.msra.mxu0 0.0
    %182 = vmatprep.subr.mxu0 0.0
    %183 = vmatpush1.msra.mxu0 0.0
    %184 = vmatprep.subr.mxu0 0.0
    %185 = vmatpush1.msra.mxu0 0.0
    %186 = vmatprep.subr.mxu0 0.0
    %187 = vmatpush1.msra.mxu0 0.0
    %188 = vmatprep.subr.mxu0 0.0
    %189 = vmatpush1.msra.mxu0 0.0
    %190 = vmatprep.subr.mxu0 0.0
    %191 = vmatpush1.msra.mxu0 0.0
    %192 = vmatprep.subr.mxu0 0.0
    %193 = vmatpush1.msra.mxu0 0.0
    %194 = vmatprep.subr.mxu0 0.0
    %195 = vmatpush1.msra.mxu0 0.0
    %196 = vmatprep.subr.mxu0 0.0
    %197 = vmatpush1.msra.mxu0 0.0
    %198 = vmatprep.subr.mxu0 0.0
    %199 = vmatpush1.msra.mxu0 0.0
    %200 = vmatprep.subr.mxu0 0.0
    %201 = vmatpush1.msra.mxu0 0.0
    %202 = vmatprep.subr.mxu0 0.0
    %203 = vmatpush1.msra.mxu0 0.0
    %204 = vmatprep.subr.mxu0 0.0
    %205 = vmatpush1.msra.mxu0 %v93
    %206 = vmatprep.subr.mxu0 0.0
    %207 = vmatpush1.msra.mxu0 %v92
    %208 = vmatprep.subr.mxu0 0.0
    %209 = vmatpush1.msra.mxu0 %v91
    %210 = vmatprep.subr.mxu0 0.0
    %211 = vmatpush1.msra.mxu0 %v90
    %212 = vmatprep.subr.mxu0 0.0
    %213 = vmatpush2.msra.mxu0 0.0
    %214 = vmatprep.subr.mxu0 0.0
    %215 = vmatpush2.msra.mxu0 0.0
    %216 = vmatprep.subr.mxu0 0.0
    %217 = vmatpush2.msra.mxu0 0.0
    %218 = vmatprep.subr.mxu0 0.0
    %219 = vmatpush2.msra.mxu0 0.0
    %220 = vmatprep.subr.mxu0 0.0
    %221 = vmatpush2.msra.mxu0 0.0
    %222 = vmatprep.subr.mxu0 0.0
    %223 = vmatpush2.msra.mxu0 0.0
    %224 = vmatprep.subr.mxu0 0.0
    %225 = vmatpush2.msra.mxu0 0.0
    %226 = vmatprep.subr.mxu0 0.0
    %227 = vmatpush2.msra.mxu0 0.0
    %228 = vmatprep.subr.mxu0 0.0
    %229 = vmatpush2.msra.mxu0 0.0
    %230 = vmatprep.subr.mxu0 0.0
    %231 = vmatpush2.msra.mxu0 0.0
    %232 = vmatprep.subr.mxu0 0.0
    %233 = vmatpush2.msra.mxu0 0.0
    %234 = vmatprep.subr.mxu0 0.0
    %235 = vmatpush2.msra.mxu0 0.0
    %236 = vmatprep.subr.mxu0 0.0
    %237 = vmatpush2.msra.mxu0 0.0
    %238 = vmatprep.subr.mxu0 0.0
    %239 = vmatpush2.msra.mxu0 0.0
    %240 = vmatprep.subr.mxu0 0.0
    %241 = vmatpush2.msra.mxu0 0.0
    %242 = vmatprep.subr.mxu0 0.0
    %243 = vmatpush2.msra.mxu0 0.0
    %244 = vmatprep.mubr.f32.mxu0 0.0
    %245 = vmatmul.mubr.f32.gmra.mxu0 %v178
    %v246 = vpop.f32.mrf.mxu0
    %v247 = vadd.f32 0.0, %v246
    %v248 = vpop.f32.mrf.mxu0
    %249 = vdwg.mxu0
    %v250 = vrcp.pop 4.0
    %v251 = vmul.f32 %v247, %v250
    %v252 = vmul.f32 %v251, %v251
    %v254 = vrot.slane %v252, 6
    %v256 = vsub.f32 %v251, %v254
    %v257 = vmax.f32 %v256, 0.0
    %v258 = vsel %vm175, %v251, %v257
    %vm259 = vcmask 64512
    %v261 = vsel %vm259, %v258, 0
    %v264 = vsel %vm259, %v90, 0
    %v267 = vsel %vm259, %v91, 0
    %v270 = vsel %vm259, %v92, 0
    %v273 = vsel %vm259, %v93, 0
    %275 = vmatprep.subr.mxu0 0.0
    %276 = vmatpush1.xpose.msra.mxu0 0.0
    %277 = vmatprep.subr.mxu0 0.0
    %278 = vmatpush1.xpose.msra.mxu0 0.0
    %279 = vmatprep.subr.mxu0 0.0
    %280 = vmatpush1.xpose.msra.mxu0 0.0
    %281 = vmatprep.subr.mxu0 0.0
    %282 = vmatpush1.xpose.msra.mxu0 0.0
    %283 = vmatprep.subr.mxu0 0.0
    %284 = vmatpush1.xpose.msra.mxu0 0.0
    %285 = vmatprep.subr.mxu0 0.0
    %286 = vmatpush1.xpose.msra.mxu0 0.0
    %287 = vmatprep.subr.mxu0 0.0
    %288 = vmatpush1.xpose.msra.mxu0 0.0
    %289 = vmatprep.subr.mxu0 0.0
    %290 = vmatpush1.xpose.msra.mxu0 0.0
    %291 = vmatprep.subr.mxu0 0.0
    %292 = vmatpush1.xpose.msra.mxu0 0.0
    %293 = vmatprep.subr.mxu0 0.0
    %294 = vmatpush1.xpose.msra.mxu0 0.0
    %295 = vmatprep.subr.mxu0 0.0
    %296 = vmatpush1.xpose.msra.mxu0 0.0
    %297 = vmatprep.subr.mxu0 0.0
    %298 = vmatpush1.xpose.msra.mxu0 0.0
    %299 = vmatprep.subr.mxu0 0.0
    %300 = vmatpush1.xpose.msra.mxu0 %v273
    %301 = vmatprep.subr.mxu0 0.0
    %302 = vmatpush1.xpose.msra.mxu0 %v270
    %303 = vmatprep.subr.mxu0 0.0
    %304 = vmatpush1.xpose.msra.mxu0 %v267
    %305 = vmatprep.subr.mxu0 0.0
    %306 = vmatpush1.xpose.msra.mxu0 %v264
    %307 = vmatprep.subr.mxu0 0.0
    %308 = vmatpush2.xpose.msra.mxu0 0.0
    %309 = vmatprep.subr.mxu0 0.0
    %310 = vmatpush2.xpose.msra.mxu0 0.0
    %311 = vmatprep.subr.mxu0 0.0
    %312 = vmatpush2.xpose.msra.mxu0 0.0
    %313 = vmatprep.subr.mxu0 0.0
    %314 = vmatpush2.xpose.msra.mxu0 0.0
    %315 = vmatprep.subr.mxu0 0.0
    %316 = vmatpush2.xpose.msra.mxu0 0.0
    %317 = vmatprep.subr.mxu0 0.0
    %318 = vmatpush2.xpose.msra.mxu0 0.0
    %319 = vmatprep.subr.mxu0 0.0
    %320 = vmatpush2.xpose.msra.mxu0 0.0
    %321 = vmatprep.subr.mxu0 0.0
    %322 = vmatpush2.xpose.msra.mxu0 0.0
    %323 = vmatprep.subr.mxu0 0.0
    %324 = vmatpush2.xpose.msra.mxu0 0.0
    %325 = vmatprep.subr.mxu0 0.0
    %326 = vmatpush2.xpose.msra.mxu0 0.0
    %327 = vmatprep.subr.mxu0 0.0
    %328 = vmatpush2.xpose.msra.mxu0 0.0
    %329 = vmatprep.subr.mxu0 0.0
    %330 = vmatpush2.xpose.msra.mxu0 0.0
    %331 = vmatprep.subr.mxu0 0.0
    %332 = vmatpush2.xpose.msra.mxu0 0.0
    %333 = vmatprep.subr.mxu0 0.0
    %334 = vmatpush2.xpose.msra.mxu0 0.0
    %335 = vmatprep.subr.mxu0 0.0
    %336 = vmatpush2.xpose.msra.mxu0 0.0
    %337 = vmatprep.subr.mxu0 0.0
    %338 = vmatpush2.xpose.msra.mxu0 0.0
    %339 = vmatprep.mubr.f32.mxu0 0.0
    %340 = vmatmul.mubr.f32.gmra.mxu0 %v261
    %v341 = vpop.f32.mrf.mxu0
    %v342 = vadd.f32 0.0, %v341
    %v343 = vpop.f32.mrf.mxu0
    %344 = vdwg.mxu0
    %v345 = vsub.f32 %v168, %v342
    %v346 = vadd.f32 %v342, 1e-05
    %v347 = vrsqrt.pop %v346
    %v349 = vrot.slane %v347, 2
    %v351 = vmul.f32 %v345, %v349
    %v352 = vlaneseq
    %v353 = vshrl.u32 %v352, 7
    %v354 = vsub.s32 1, %v353
    %v355 = vrot.slane %v84, %v354
    %v356 = vmul.f32 %v351, %v355
    %v357 = vlaneseq
    %v358 = vshrl.u32 %v357, 7
    %v359 = vsub.s32 2, %v358
    %v360 = vrot.slane %v84, %v359
    %v361 = vadd.f32 %v356, %v360
    %v362 = vmul.f32 %v361, 0.5
    %v363 = vmul.f32 %v361, 0.70710677
    %v364 = verf.f32.pop %v363
    %v365 = vadd.f32 %v364, 1.0
    %v366 = vmul.f32 %v362, %v365
    %v367 = vld [vmem:[%s3] sm:$0xff]
    %v368 = vld [vmem:[%s3 + $0x8] sm:$0xff]
    %v369 = vld [vmem:[%s3 + $0x10] sm:$0xff]
    %v370 = vld [vmem:[%s3 + $0x18] sm:$0xff]
    %v371 = vld [vmem:[%s4] sm:$0xff]
    %v372 = vld [vmem:[%s4 + $0x8] sm:$0xff]
    %v373 = vlaneseq
    %v374 = vshrl.u32 %v373, 7
    %v375 = vsub.s32 0, %v374
    %v376 = vrot.slane %v85, %v375
    %v378 = vsel %vm37, %v366, 0
    %380 = vmatprep.subr.mxu0 0.0
    %381 = vmatpush1.msra.mxu0 0.0
    %382 = vmatprep.subr.mxu0 0.0
    %383 = vmatpush1.msra.mxu0 0.0
    %384 = vmatprep.subr.mxu0 0.0
    %385 = vmatpush1.msra.mxu0 0.0
    %386 = vmatprep.subr.mxu0 0.0
    %387 = vmatpush1.msra.mxu0 0.0
    %388 = vmatprep.subr.mxu0 0.0
    %389 = vmatpush1.msra.mxu0 0.0
    %390 = vmatprep.subr.mxu0 0.0
    %391 = vmatpush1.msra.mxu0 0.0
    %392 = vmatprep.subr.mxu0 0.0
    %393 = vmatpush1.msra.mxu0 0.0
    %394 = vmatprep.subr.mxu0 0.0
    %395 = vmatpush1.msra.mxu0 0.0
    %396 = vmatprep.subr.mxu0 0.0
    %397 = vmatpush1.msra.mxu0 0.0
    %398 = vmatprep.subr.mxu0 0.0
    %399 = vmatpush1.msra.mxu0 0.0
    %400 = vmatprep.subr.mxu0 0.0
    %401 = vmatpush1.msra.mxu0 0.0
    %402 = vmatprep.subr.mxu0 0.0
    %403 = vmatpush1.msra.mxu0 0.0
    %404 = vmatprep.subr.mxu0 0.0
    %405 = vmatpush1.msra.mxu0 %v370
    %406 = vmatprep.subr.mxu0 0.0
    %407 = vmatpush1.msra.mxu0 %v369
    %408 = vmatprep.subr.mxu0 0.0
    %409 = vmatpush1.msra.mxu0 %v368
    %410 = vmatprep.subr.mxu0 0.0
    %411 = vmatpush1.msra.mxu0 %v367
    %412 = vmatprep.subr.mxu0 0.0
    %413 = vmatpush2.msra.mxu0 0.0
    %414 = vmatprep.subr.mxu0 0.0
    %415 = vmatpush2.msra.mxu0 0.0
    %416 = vmatprep.subr.mxu0 0.0
    %417 = vmatpush2.msra.mxu0 0.0
    %418 = vmatprep.subr.mxu0 0.0
    %419 = vmatpush2.msra.mxu0 0.0
    %420 = vmatprep.subr.mxu0 0.0
    %421 = vmatpush2.msra.mxu0 0.0
    %422 = vmatprep.subr.mxu0 0.0
    %423 = vmatpush2.msra.mxu0 0.0
    %424 = vmatprep.subr.mxu0 0.0
    %425 = vmatpush2.msra.mxu0 0.0
    %426 = vmatprep.subr.mxu0 0.0
    %427 = vmatpush2.msra.mxu0 0.0
    %428 = vmatprep.subr.mxu0 0.0
    %429 = vmatpush2.msra.mxu0 0.0
    %430 = vmatprep.subr.mxu0 0.0
    %431 = vmatpush2.msra.mxu0 0.0
    %432 = vmatprep.subr.mxu0 0.0
    %433 = vmatpush2.msra.mxu0 0.0
    %434 = vmatprep.subr.mxu0 0.0
    %435 = vmatpush2.msra.mxu0 0.0
    %436 = vmatprep.subr.mxu0 0.0
    %437 = vmatpush2.msra.mxu0 0.0
    %438 = vmatprep.subr.mxu0 0.0
    %439 = vmatpush2.msra.mxu0 0.0
    %440 = vmatprep.subr.mxu0 0.0
    %441 = vmatpush2.msra.mxu0 0.0
    %442 = vmatprep.subr.mxu0 0.0
    %443 = vmatpush2.msra.mxu0 0.0
    %444 = vmatprep.mubr.f32.mxu0 0.0
    %445 = vmatmul.mubr.f32.gmra.mxu0 %v378
    %v446 = vpop.f32.mrf.mxu0
    %v447 = vadd.f32 %v376, %v446
    %v448 = vpop.f32.mrf.mxu0
    %449 = vdwg.mxu0
    %v450 = vmul.f32 %v447, %v447
    %v452 = vrot.slane %v450, 6
    %v454 = vsel %vm175, %v447, %v452
    %vm455 = vcmask 130048
    %v457 = vsel %vm455, %v454, 0
    %459 = vmatprep.subr.mxu0 0.0
    %460 = vmatpush1.msra.mxu0 0.0
    %461 = vmatprep.subr.mxu0 0.0
    %462 = vmatpush1.msra.mxu0 0.0
    %463 = vmatprep.subr.mxu0 0.0
    %464 = vmatpush1.msra.mxu0 0.0
    %465 = vmatprep.subr.mxu0 0.0
    %466 = vmatpush1.msra.mxu0 0.0
    %467 = vmatprep.subr.mxu0 0.0
    %468 = vmatpush1.msra.mxu0 0.0
    %469 = vmatprep.subr.mxu0 0.0
    %470 = vmatpush1.msra.mxu0 0.0
    %471 = vmatprep.subr.mxu0 0.0
    %472 = vmatpush1.msra.mxu0 0.0
    %473 = vmatprep.subr.mxu0 0.0
    %474 = vmatpush1.msra.mxu0 0.0
    %475 = vmatprep.subr.mxu0 0.0
    %476 = vmatpush1.msra.mxu0 0.0
    %477 = vmatprep.subr.mxu0 0.0
    %478 = vmatpush1.msra.mxu0 0.0
    %479 = vmatprep.subr.mxu0 0.0
    %480 = vmatpush1.msra.mxu0 0.0
    %481 = vmatprep.subr.mxu0 0.0
    %482 = vmatpush1.msra.mxu0 0.0
    %483 = vmatprep.subr.mxu0 0.0
    %484 = vmatpush1.msra.mxu0 0.0
    %485 = vmatprep.subr.mxu0 0.0
    %486 = vmatpush1.msra.mxu0 0.0
    %487 = vmatprep.subr.mxu0 0.0
    %488 = vmatpush1.msra.mxu0 %v372
    %489 = vmatprep.subr.mxu0 0.0
    %490 = vmatpush1.msra.mxu0 %v371
    %491 = vmatprep.subr.mxu0 0.0
    %492 = vmatpush2.msra.mxu0 0.0
    %493 = vmatprep.subr.mxu0 0.0
    %494 = vmatpush2.msra.mxu0 0.0
    %495 = vmatprep.subr.mxu0 0.0
    %496 = vmatpush2.msra.mxu0 0.0
    %497 = vmatprep.subr.mxu0 0.0
    %498 = vmatpush2.msra.mxu0 0.0
    %499 = vmatprep.subr.mxu0 0.0
    %500 = vmatpush2.msra.mxu0 0.0
    %501 = vmatprep.subr.mxu0 0.0
    %502 = vmatpush2.msra.mxu0 0.0
    %503 = vmatprep.subr.mxu0 0.0
    %504 = vmatpush2.msra.mxu0 0.0
    %505 = vmatprep.subr.mxu0 0.0
    %506 = vmatpush2.msra.mxu0 0.0
    %507 = vmatprep.subr.mxu0 0.0
    %508 = vmatpush2.msra.mxu0 0.0
    %509 = vmatprep.subr.mxu0 0.0
    %510 = vmatpush2.msra.mxu0 0.0
    %511 = vmatprep.subr.mxu0 0.0
    %512 = vmatpush2.msra.mxu0 0.0
    %513 = vmatprep.subr.mxu0 0.0
    %514 = vmatpush2.msra.mxu0 0.0
    %515 = vmatprep.subr.mxu0 0.0
    %516 = vmatpush2.msra.mxu0 0.0
    %517 = vmatprep.subr.mxu0 0.0
    %518 = vmatpush2.msra.mxu0 0.0
    %519 = vmatprep.subr.mxu0 0.0
    %520 = vmatpush2.msra.mxu0 0.0
    %521 = vmatprep.subr.mxu0 0.0
    %522 = vmatpush2.msra.mxu0 0.0
    %523 = vmatprep.mubr.f32.mxu0 0.0
    %524 = vmatmul.mubr.f32.gmra.mxu0 %v457
    %v525 = vpop.f32.mrf.mxu0
    %v526 = vadd.f32 0.0, %v525
    %v527 = vpop.f32.mrf.mxu0
    %528 = vdwg.mxu0
    %v529 = vrcp.pop 2.0
    %v530 = vmul.f32 %v526, %v529
    %v531 = vmul.f32 %v530, %v530
    %v533 = vrot.slane %v531, 6
    %v535 = vsub.f32 %v530, %v533
    %v536 = vmax.f32 %v535, 0.0
    %v537 = vsel %vm175, %v530, %v536
    %v539 = vsel %vm259, %v537, 0
    %v542 = vsel %vm259, %v371, 0
    %v545 = vsel %vm259, %v372, 0
    %547 = vmatprep.subr.mxu0 0.0
    %548 = vmatpush1.xpose.msra.mxu0 0.0
    %549 = vmatprep.subr.mxu0 0.0
    %550 = vmatpush1.xpose.msra.mxu0 0.0
    %551 = vmatprep.subr.mxu0 0.0
    %552 = vmatpush1.xpose.msra.mxu0 0.0
    %553 = vmatprep.subr.mxu0 0.0
    %554 = vmatpush1.xpose.msra.mxu0 0.0
    %555 = vmatprep.subr.mxu0 0.0
    %556 = vmatpush1.xpose.msra.mxu0 0.0
    %557 = vmatprep.subr.mxu0 0.0
    %558 = vmatpush1.xpose.msra.mxu0 0.0
    %559 = vmatprep.subr.mxu0 0.0
    %560 = vmatpush1.xpose.msra.mxu0 0.0
    %561 = vmatprep.subr.mxu0 0.0
    %562 = vmatpush1.xpose.msra.mxu0 0.0
    %563 = vmatprep.subr.mxu0 0.0
    %564 = vmatpush1.xpose.msra.mxu0 0.0
    %565 = vmatprep.subr.mxu0 0.0
    %566 = vmatpush1.xpose.msra.mxu0 0.0
    %567 = vmatprep.subr.mxu0 0.0
    %568 = vmatpush1.xpose.msra.mxu0 0.0
    %569 = vmatprep.subr.mxu0 0.0
    %570 = vmatpush1.xpose.msra.mxu0 0.0
    %571 = vmatprep.subr.mxu0 0.0
    %572 = vmatpush1.xpose.msra.mxu0 0.0
    %573 = vmatprep.subr.mxu0 0.0
    %574 = vmatpush1.xpose.msra.mxu0 0.0
    %575 = vmatprep.subr.mxu0 0.0
    %576 = vmatpush1.xpose.msra.mxu0 %v545
    %577 = vmatprep.subr.mxu0 0.0
    %578 = vmatpush1.xpose.msra.mxu0 %v542
    %579 = vmatprep.subr.mxu0 0.0
    %580 = vmatpush2.xpose.msra.mxu0 0.0
    %581 = vmatprep.subr.mxu0 0.0
    %582 = vmatpush2.xpose.msra.mxu0 0.0
    %583 = vmatprep.subr.mxu0 0.0
    %584 = vmatpush2.xpose.msra.mxu0 0.0
    %585 = vmatprep.subr.mxu0 0.0
    %586 = vmatpush2.xpose.msra.mxu0 0.0
    %587 = vmatprep.subr.mxu0 0.0
    %588 = vmatpush2.xpose.msra.mxu0 0.0
    %589 = vmatprep.subr.mxu0 0.0
    %590 = vmatpush2.xpose.msra.mxu0 0.0
    %591 = vmatprep.subr.mxu0 0.0
    %592 = vmatpush2.xpose.msra.mxu0 0.0
    %593 = vmatprep.subr.mxu0 0.0
    %594 = vmatpush2.xpose.msra.mxu0 0.0
    %595 = vmatprep.subr.mxu0 0.0
    %596 = vmatpush2.xpose.msra.mxu0 0.0
    %597 = vmatprep.subr.mxu0 0.0
    %598 = vmatpush2.xpose.msra.mxu0 0.0
    %599 = vmatprep.subr.mxu0 0.0
    %600 = vmatpush2.xpose.msra.mxu0 0.0
    %601 = vmatprep.subr.mxu0 0.0
    %602 = vmatpush2.xpose.msra.mxu0 0.0
    %603 = vmatprep.subr.mxu0 0.0
    %604 = vmatpush2.xpose.msra.mxu0 0.0
    %605 = vmatprep.subr.mxu0 0.0
    %606 = vmatpush2.xpose.msra.mxu0 0.0
    %607 = vmatprep.subr.mxu0 0.0
    %608 = vmatpush2.xpose.msra.mxu0 0.0
    %609 = vmatprep.subr.mxu0 0.0
    %610 = vmatpush2.xpose.msra.mxu0 0.0
    %611 = vmatprep.mubr.f32.mxu0 0.0
    %612 = vmatmul.mubr.f32.gmra.mxu0 %v539
    %v613 = vpop.f32.mrf.mxu0
    %v614 = vadd.f32 0.0, %v613
    %v615 = vpop.f32.mrf.mxu0
    %616 = vdwg.mxu0
    %v617 = vsub.f32 %v447, %v614
    %v618 = vadd.f32 %v614, 1e-05
    %v619 = vrsqrt.pop %v618
    %v621 = vrot.slane %v619, 2
    %v623 = vmul.f32 %v617, %v621
    %v624 = vlaneseq
    %v625 = vshrl.u32 %v624, 7
    %v626 = vsub.s32 1, %v625
    %v627 = vrot.slane %v85, %v626
    %v628 = vmul.f32 %v623, %v627
    %v629 = vlaneseq
    %v630 = vshrl.u32 %v629, 7
    %v631 = vsub.s32 2, %v630
    %v632 = vrot.slane %v85, %v631
    %v633 = vadd.f32 %v628, %v632
    %v634 = vmul.f32 %v633, 0.5
    %v635 = vmul.f32 %v633, 0.70710677
    %v636 = verf.f32.pop %v635
    %v637 = vadd.f32 %v636, 1.0
    %v638 = vmul.f32 %v634, %v637
    %v639 = vld [vmem:[%s6] sm:$0xff]
    %v640 = vld [vmem:[%s6 + $0x8] sm:$0xff]
    %v641 = vld [vmem:[#allocation3] sm:$0x1]
    %v643 = vlaneseq
    %v644 = vshrl.u32 %v643, 7
    %v645 = vsub.s32 0, %v644
    %v646 = vrot.slane %v641, %v645
    %v649 = vsel %vm455, %v638, 0
    %651 = vmatprep.subr.mxu0 0.0
    %652 = vmatpush1.msra.mxu0 0.0
    %653 = vmatprep.subr.mxu0 0.0
    %654 = vmatpush1.msra.mxu0 0.0
    %655 = vmatprep.subr.mxu0 0.0
    %656 = vmatpush1.msra.mxu0 0.0
    %657 = vmatprep.subr.mxu0 0.0
    %658 = vmatpush1.msra.mxu0 0.0
    %659 = vmatprep.subr.mxu0 0.0
    %660 = vmatpush1.msra.mxu0 0.0
    %661 = vmatprep.subr.mxu0 0.0
    %662 = vmatpush1.msra.mxu0 0.0
    %663 = vmatprep.subr.mxu0 0.0
    %664 = vmatpush1.msra.mxu0 0.0
    %665 = vmatprep.subr.mxu0 0.0
    %666 = vmatpush1.msra.mxu0 0.0
    %667 = vmatprep.subr.mxu0 0.0
    %668 = vmatpush1.msra.mxu0 0.0
    %669 = vmatprep.subr.mxu0 0.0
    %670 = vmatpush1.msra.mxu0 0.0
    %671 = vmatprep.subr.mxu0 0.0
    %672 = vmatpush1.msra.mxu0 0.0
    %673 = vmatprep.subr.mxu0 0.0
    %674 = vmatpush1.msra.mxu0 0.0
    %675 = vmatprep.subr.mxu0 0.0
    %676 = vmatpush1.msra.mxu0 0.0
    %677 = vmatprep.subr.mxu0 0.0
    %678 = vmatpush1.msra.mxu0 0.0
    %679 = vmatprep.subr.mxu0 0.0
    %680 = vmatpush1.msra.mxu0 %v640
    %681 = vmatprep.subr.mxu0 0.0
    %682 = vmatpush1.msra.mxu0 %v639
    %683 = vmatprep.subr.mxu0 0.0
    %684 = vmatpush2.msra.mxu0 0.0
    %685 = vmatprep.subr.mxu0 0.0
    %686 = vmatpush2.msra.mxu0 0.0
    %687 = vmatprep.subr.mxu0 0.0
    %688 = vmatpush2.msra.mxu0 0.0
    %689 = vmatprep.subr.mxu0 0.0
    %690 = vmatpush2.msra.mxu0 0.0
    %691 = vmatprep.subr.mxu0 0.0
    %692 = vmatpush2.msra.mxu0 0.0
    %693 = vmatprep.subr.mxu0 0.0
    %694 = vmatpush2.msra.mxu0 0.0
    %695 = vmatprep.subr.mxu0 0.0
    %696 = vmatpush2.msra.mxu0 0.0
    %697 = vmatprep.subr.mxu0 0.0
    %698 = vmatpush2.msra.mxu0 0.0
    %699 = vmatprep.subr.mxu0 0.0
    %700 = vmatpush2.msra.mxu0 0.0
    %701 = vmatprep.subr.mxu0 0.0
    %702 = vmatpush2.msra.mxu0 0.0
    %703 = vmatprep.subr.mxu0 0.0
    %704 = vmatpush2.msra.mxu0 0.0
    %705 = vmatprep.subr.mxu0 0.0
    %706 = vmatpush2.msra.mxu0 0.0
    %707 = vmatprep.subr.mxu0 0.0
    %708 = vmatpush2.msra.mxu0 0.0
    %709 = vmatprep.subr.mxu0 0.0
    %710 = vmatpush2.msra.mxu0 0.0
    %711 = vmatprep.subr.mxu0 0.0
    %712 = vmatpush2.msra.mxu0 0.0
    %713 = vmatprep.subr.mxu0 0.0
    %714 = vmatpush2.msra.mxu0 0.0
    %715 = vmatprep.mubr.f32.mxu0 0.0
    %716 = vmatmul.mubr.f32.gmra.mxu0 %v649
    %v717 = vpop.f32.mrf.mxu0
    %v718 = vadd.f32 %v646, %v717
    %v719 = vpop.f32.mrf.mxu0
    %720 = vdwg.mxu0
    %vm721 = vcmask 1024
    %722 = vst.msk [vmem:[%s8] sm:$0x3] %vm721, %v718
  $region41: #{tpu_custom_call.1} parent=0 // pred_fallthru
    _
  // Predicated region
  $region42: #{tpu_custom_call.1} parent=0 // pred_check
    _
  $region43: #{tpu_custom_call.1} parent=0 // pred_check_branch
    %724 = sbr.rel (0) target = $region45
  $region44: #{tpu_custom_call.1} parent=0 // pred_region
    _
  $region45: #{tpu_custom_call.1} parent=0 // pred_fallthru
    _
  // Predicated region
  $region46: #{tpu_custom_call.1} parent=0 // pred_check
    _
  $region47: #{tpu_custom_call.1} parent=0 // pred_check_branch
    %726 = sbr.rel (0) target = $region49
  $region48: #{tpu_custom_call.1} parent=0 // pred_region
    _
  $region49: #{tpu_custom_call.1} parent=0 // pred_fallthru
    _

</llo_original>
